<compile_context>
chip_gen: v7x
topology: tpu7x:2x2x1
jax: 0.10.0
libtpu: 0.0.40
codegen_flags: <defaults>
</compile_context>

<pallas_src>
import jax
import jax.numpy as jnp
from jax.experimental import pallas as pl
from jax.experimental.pallas import tpu as pltpu


_MAX_BLOCK_ROWS = 8192                  # 8192 * 128 * 4 B = 4 MiB / f32 operand / step
_VMEM_LIMIT_BYTES = 40 * 1024 * 1024    # covers 3 streams x 2 bufs x 4 MiB (v5e default is 16 MiB)


def _round_up(x, m):
    return ((x + m - 1) // m) * m


def _sublane_multiple(dtype):
    # f32 -> 8, bf16/fp16 -> 16, int8/fp8 -> 32 (sublane packing of the streamed tile).
    return 8 * max(1, 4 // jnp.dtype(dtype).itemsize)


def _bbox_transform_kernel(boxes_ref, deltas_ref, std_ref, mean_ref, out_ref):
    # boxes_ref / deltas_ref: (block_rows, 128) tiles in the caller dtype whose lanes
    # are interleaved (x1, y1, x2, y2) / (dx, dy, dw, dh) groups of 4.
    # std_ref / mean_ref: (1, 128) f32 lane-tiled [s0, s1, s2, s3, s0, s1, ...].
    # out_ref: (block_rows, 128) f32.
    b = boxes_ref[...].astype(jnp.float32)
    d = deltas_ref[...].astype(jnp.float32)

    lanes = b.shape[1]                          # always 128

    # Scaled deltas: lanes 4k..4k+3 hold dx', dy', dw', dh'.
    ds = d * std_ref[...] + mean_ref[...]

    # Lane rotations on the XLU (extended slot) instead of concat-of-slices.
    # shift = lanes - 2  ==  roll by -2  (out[..., i] = in[..., i + 2]).
    b_l2 = pltpu.roll(b, shift=lanes - 2, axis=1)
    ds_l2 = pltpu.roll(ds, shift=lanes - 2, axis=1)

    # Valid at lanes 4k (x) and 4k+1 (y); other lanes are don't-care and are
    # masked out by the final select (wrap-around lanes are never consumed).
    wh = b_l2 - b                               # widths, heights
    ctr = b + 0.5 * wh                          # ctr_x, ctr_y
    pred_ctr = ctr + ds * wh                    # pred_ctr_x, pred_ctr_y
    half_pwh = 0.5 * (jnp.exp(ds_l2) * wh)      # 0.5*pred_w, 0.5*pred_h (hoisted, reused)
    lo = pred_ctr - half_pwh                    # pred x1, y1 at lanes 4k, 4k+1
    hi = pred_ctr + half_pwh                    # pred x2, y2 at lanes 4k, 4k+1
    hi_r2 = pltpu.roll(hi, shift=2, axis=1)     # out[..., i] = hi[..., i - 2]

    lane = jax.lax.broadcasted_iota(jnp.int32, (1, lanes), 1)
    is_lo = (lane % 4) < 2                      # broadcasts over sublanes
    out_ref[...] = jnp.where(is_lo, lo, hi_r2).astype(out_ref.dtype)


def _bbox_transform_bulk(boxes2d, deltas2d, mean, std):
    """boxes2d, deltas2d: (R, 128) lane-interleaved views (native dtype). Returns (R, 128) f32."""
    R = boxes2d.shape[0]

    std_pat = jnp.tile(std.astype(jnp.float32).reshape(1, 4), (1, 32))     # (1, 128)
    mean_pat = jnp.tile(mean.astype(jnp.float32).reshape(1, 4), (1, 32))   # (1, 128)

    sub = max(_sublane_multiple(boxes2d.dtype), _sublane_multiple(deltas2d.dtype))
    if R < 2 * sub:
        block_rows = R                          # single full-extent block
    else:
        # >= 2 grid steps (dual TC on v7x), sublane-aligned, capped at 4 MiB/operand.
        block_rows = min(_MAX_BLOCK_ROWS, _round_up(pl.cdiv(R, 2), sub))
    grid = (pl.cdiv(R, block_rows),)

    n_boxes = R * 32
    in_bytes = R * 128 * (boxes2d.dtype.itemsize + deltas2d.dtype.itemsize)

    return pl.pallas_call(
        _bbox_transform_kernel,
        out_shape=jax.ShapeDtypeStruct((R, 128), jnp.float32),
        grid_spec=pltpu.PrefetchScalarGridSpec(
            num_scalar_prefetch=0,
            grid=grid,
            in_specs=[
                pl.BlockSpec((block_rows, 128), lambda m: (m, 0)),
                pl.BlockSpec((block_rows, 128), lambda m: (m, 0)),
                pl.BlockSpec((1, 128), lambda m: (0, 0)),
                pl.BlockSpec((1, 128), lambda m: (0, 0)),
            ],
            out_specs=pl.BlockSpec((block_rows, 128), lambda m: (m, 0)),
        ),
        compiler_params=pltpu.CompilerParams(
            dimension_semantics=("parallel",),
            vmem_limit_bytes=_VMEM_LIMIT_BYTES,
        ),
        cost_estimate=pl.CostEstimate(
            flops=28 * n_boxes,
            transcendentals=2 * n_boxes,
            bytes_accessed=in_bytes + R * 128 * 4,
        ),
    )(boxes2d, deltas2d, std_pat, mean_pat)


def _bbox_transform_jnp(boxes, deltas, mean, std):
    """Plain-jnp tail path for < 32 leftover boxes. boxes/deltas: (n, 4)."""
    boxes = boxes.astype(jnp.float32)
    deltas = deltas.astype(jnp.float32)
    widths = boxes[:, 2] - boxes[:, 0]
    heights = boxes[:, 3] - boxes[:, 1]
    ctr_x = boxes[:, 0] + 0.5 * widths
    ctr_y = boxes[:, 1] + 0.5 * heights
    dx = deltas[:, 0] * std[0] + mean[0]
    dy = deltas[:, 1] * std[1] + mean[1]
    dw = deltas[:, 2] * std[2] + mean[2]
    dh = deltas[:, 3] * std[3] + mean[3]
    pred_ctr_x = ctr_x + dx * widths
    pred_ctr_y = ctr_y + dy * heights
    pred_w = jnp.exp(dw) * widths
    pred_h = jnp.exp(dh) * heights
    return jnp.stack(
        [pred_ctr_x - 0.5 * pred_w, pred_ctr_y - 0.5 * pred_h,
         pred_ctr_x + 0.5 * pred_w, pred_ctr_y + 0.5 * pred_h],
        axis=1,
    )


@jax.jit
def bbox_transform(boxes, deltas, mean, std):
    """boxes, deltas: (B, N, 4). Returns pred_boxes (B, N, 4) in float32
    (matches the PyTorch module: float32 mean/std promote the result)."""
    B, N, C = boxes.shape
    assert C == 4
    # TPU streams at <= 32-bit; anything wider is narrowed up front.
    if jnp.dtype(boxes.dtype).itemsize > 4:
        boxes = boxes.astype(jnp.float32)
    if jnp.dtype(deltas.dtype).itemsize > 4:
        deltas = deltas.astype(jnp.float32)

    total_boxes = B * N
    n_bulk = (total_boxes // 32) * 32           # 32 boxes == 128 lanes
    boxes_flat = boxes.reshape(total_boxes, 4)
    deltas_flat = deltas.reshape(total_boxes, 4)

    parts = []
    if n_bulk:
        R = n_bulk // 32
        # Contiguous data: these reshapes are free views, no extra HBM pass.
        boxes2d = boxes_flat[:n_bulk].reshape(R, 128)
        deltas2d = deltas_flat[:n_bulk].reshape(R, 128)
        bulk = _bbox_transform_bulk(boxes2d, deltas2d, mean, std)
        parts.append(bulk.reshape(n_bulk, 4))
    if n_bulk < total_boxes:
        parts.append(
            _bbox_transform_jnp(boxes_flat[n_bulk:], deltas_flat[n_bulk:], mean, std))

    out = parts[0] if len(parts) == 1 else jnp.concatenate(parts, axis=0)
    return out.reshape(B, N, 4)


def _reference(boxes, deltas, mean, std):
    boxes = boxes.astype(jnp.float32)
    deltas = deltas.astype(jnp.float32)
    widths = boxes[:, :, 2] - boxes[:, :, 0]
    heights = boxes[:, :, 3] - boxes[:, :, 1]
    ctr_x = boxes[:, :, 0] + 0.5 * widths
    ctr_y = boxes[:, :, 1] + 0.5 * heights
    dx = deltas[:, :, 0] * std[0] + mean[0]
    dy = deltas[:, :, 1] * std[1] + mean[1]
    dw = deltas[:, :, 2] * std[2] + mean[2]
    dh = deltas[:, :, 3] * std[3] + mean[3]
    pred_ctr_x = ctr_x + dx * widths
    pred_ctr_y = ctr_y + dy * heights
    pred_w = jnp.exp(dw) * widths
    pred_h = jnp.exp(dh) * heights
    return jnp.stack(
        [pred_ctr_x - 0.5 * pred_w, pred_ctr_y - 0.5 * pred_h,
         pred_ctr_x + 0.5 * pred_w, pred_ctr_y + 0.5 * pred_h],
        axis=2,
    )


def _make_inputs(key, B, N, dtype):
    k1, k2, k3 = jax.random.split(key, 3)
    xy = jax.random.uniform(k1, (B, N, 2), jnp.float32, 0.0, 50.0)
    wh = jax.random.uniform(k2, (B, N, 2), jnp.float32, 1.0, 30.0)
    boxes = jnp.concatenate([xy, xy + wh], axis=-1).astype(dtype)        # (B, N, 4)
    deltas = jax.random.normal(k3, (B, N, 4), jnp.float32).astype(dtype)  # (B, N, 4)
    return boxes, deltas


if __name__ == "__main__":
    key = jax.random.PRNGKey(0)
    # Module defaults from __init__ (mean=None, std=None).
    mean = jnp.array([0.0, 0.0, 0.0, 0.0], jnp.float32)
    std = jnp.array([0.1, 0.1, 0.2, 0.2], jnp.float32)

    # Test 1: f32, 32-box-aligned (R = 16 -> exercises a 2-step parallel grid).
    k1, k2, k3 = jax.random.split(key, 3)
    boxes, deltas = _make_inputs(k1, 2, 256, jnp.float32)
    out = bbox_transform(boxes, deltas, mean, std)
    jax.block_until_ready(out)
    ref = _reference(boxes, deltas, mean, std)
    assert out.shape == (2, 256, 4) and out.dtype == jnp.float32
    assert jnp.allclose(out, ref, atol=1e-4, rtol=1e-4)

    # Test 2: f32 with a non-32-aligned box count -> bulk (Pallas) + tail (jnp).
    boxes_t, deltas_t = _make_inputs(k2, 1, 37, jnp.float32)
    out_t = bbox_transform(boxes_t, deltas_t, mean, std)
    jax.block_until_ready(out_t)
    ref_t = _reference(boxes_t, deltas_t, mean, std)
    assert out_t.shape == (1, 37, 4) and out_t.dtype == jnp.float32
    assert jnp.allclose(out_t, ref_t, atol=1e-4, rtol=1e-4)

    # Test 3: bf16 inputs streamed natively (half the input DMA), f32 output.
    boxes_b, deltas_b = _make_inputs(k3, 2, 64, jnp.bfloat16)
    out_b = bbox_transform(boxes_b, deltas_b, mean, std)
    jax.block_until_ready(out_b)
    ref_b = _reference(boxes_b, deltas_b, mean, std)
    assert out_b.shape == (2, 64, 4) and out_b.dtype == jnp.float32
    assert jnp.allclose(out_b, ref_b, atol=1e-2, rtol=1e-3)

    print("KERNEL_OK")
</pallas_src>

<mosaic_0001>
module attributes {stable_mosaic.version = 11 : i64} {
  func.func @_bbox_transform_kernel(%arg0: i32, %arg1: memref<8x128xf32, #tpu.memory_space<vmem>>, %arg2: memref<8x128xf32, #tpu.memory_space<vmem>>, %arg3: memref<1x128xf32, #tpu.memory_space<vmem>>, %arg4: memref<1x128xf32, #tpu.memory_space<vmem>>, %arg5: memref<8x128xf32, #tpu.memory_space<vmem>>) attributes {dimension_semantics = [#tpu.dimension_semantics<parallel>], iteration_bounds = array<i64: 2>, scalar_prefetch = 0 : i64, scratch_operands = 0 : i64, tpu.core_type = #tpu.core_type<tc>, window_params = [{transform_indices = @transform_0, window_bounds = array<i64: 8, 128>}, {transform_indices = @transform_1, window_bounds = array<i64: 8, 128>}, {pipeline_mode = #tpu.pipeline_mode<synchronous>, transform_indices = @transform_2, window_bounds = array<i64: 1, 128>}, {pipeline_mode = #tpu.pipeline_mode<synchronous>, transform_indices = @transform_3, window_bounds = array<i64: 1, 128>}, {transform_indices = @transform_4, window_bounds = array<i64: 8, 128>}]} {
    %c0 = arith.constant 0 : index
    %c0_0 = arith.constant 0 : index
    %0 = vector.load %arg1[%c0, %c0_0] : memref<8x128xf32, #tpu.memory_space<vmem>>, vector<8x128xf32>
    %c0_1 = arith.constant 0 : index
    %c0_2 = arith.constant 0 : index
    %1 = vector.load %arg2[%c0_1, %c0_2] : memref<8x128xf32, #tpu.memory_space<vmem>>, vector<8x128xf32>
    %c0_3 = arith.constant 0 : index
    %c0_4 = arith.constant 0 : index
    %2 = vector.load %arg3[%c0_3, %c0_4] : memref<1x128xf32, #tpu.memory_space<vmem>>, vector<1x128xf32>
    %3 = vector.broadcast %2 : vector<1x128xf32> to vector<8x128xf32>
    %4 = arith.mulf %1, %3 : vector<8x128xf32>
    %c0_5 = arith.constant 0 : index
    %c0_6 = arith.constant 0 : index
    %5 = vector.load %arg4[%c0_5, %c0_6] : memref<1x128xf32, #tpu.memory_space<vmem>>, vector<1x128xf32>
    %6 = vector.broadcast %5 : vector<1x128xf32> to vector<8x128xf32>
    %7 = arith.addf %4, %6 : vector<8x128xf32>
    %c126_i32 = arith.constant 126 : i32
    %8 = tpu.dynamic_rotate %0 by %c126_i32 dim 1 : vector<8x128xf32>, i32 -> vector<8x128xf32>
    %c126_i32_7 = arith.constant 126 : i32
    %9 = tpu.dynamic_rotate %7 by %c126_i32_7 dim 1 : vector<8x128xf32>, i32 -> vector<8x128xf32>
    %10 = arith.subf %8, %0 : vector<8x128xf32>
    %cst = arith.constant 5.000000e-01 : f32
    %11 = vector.broadcast %cst : f32 to vector<8x128xf32>
    %12 = arith.mulf %11, %10 : vector<8x128xf32>
    %13 = arith.addf %0, %12 : vector<8x128xf32>
    %14 = arith.mulf %7, %10 : vector<8x128xf32>
    %15 = arith.addf %13, %14 : vector<8x128xf32>
    %16 = math.exp %9 : vector<8x128xf32>
    %17 = arith.mulf %16, %10 : vector<8x128xf32>
    %cst_8 = arith.constant 5.000000e-01 : f32
    %18 = vector.broadcast %cst_8 : f32 to vector<8x128xf32>
    %19 = arith.mulf %18, %17 : vector<8x128xf32>
    %20 = arith.subf %15, %19 : vector<8x128xf32>
    %21 = arith.addf %15, %19 : vector<8x128xf32>
    %c2_i32 = arith.constant 2 : i32
    %22 = tpu.dynamic_rotate %21 by %c2_i32 dim 1 : vector<8x128xf32>, i32 -> vector<8x128xf32>
    %23 = tpu.iota {dimensions = array<i32: 1>} : vector<1x128xi32>
    %c4_i32 = arith.constant 4 : i32
    %c0_i32 = arith.constant 0 : i32
    %24 = arith.cmpi eq, %c4_i32, %c0_i32 : i32
    %c1_i32 = arith.constant 1 : i32
    %25 = arith.select %24, %c1_i32, %c4_i32 : i32
    %26 = vector.broadcast %25 : i32 to vector<1x128xi32>
    %27 = arith.remsi %23, %26 : vector<1x128xi32>
    %c0_i32_9 = arith.constant 0 : i32
    %28 = vector.broadcast %c0_i32_9 : i32 to vector<1x128xi32>
    %29 = arith.cmpi ne, %27, %28 : vector<1x128xi32>
    %c0_i32_10 = arith.constant 0 : i32
    %30 = vector.broadcast %c0_i32_10 : i32 to vector<1x128xi32>
    %31 = arith.cmpi slt, %27, %30 : vector<1x128xi32>
    %c0_i32_11 = arith.constant 0 : i32
    %32 = arith.cmpi slt, %25, %c0_i32_11 : i32
    %33 = vector.broadcast %32 : i1 to vector<1x128xi1>
    %34 = vector.broadcast %33 : vector<1x128xi1> to vector<1x128xi1>
    %35 = arith.xori %31, %34 : vector<1x128xi1>
    %36 = arith.andi %35, %29 : vector<1x128xi1>
    %37 = vector.broadcast %25 : i32 to vector<1x128xi32>
    %38 = arith.addi %27, %37 : vector<1x128xi32>
    %39 = arith.select %36, %38, %27 : vector<1x128xi1>, vector<1x128xi32>
    %c2_i32_12 = arith.constant 2 : i32
    %40 = vector.broadcast %c2_i32_12 : i32 to vector<1x128xi32>
    %41 = arith.cmpi slt, %39, %40 : vector<1x128xi32>
    %42 = vector.shape_cast %41 : vector<1x128xi1> to vector<1x128xi1>
    %43 = vector.broadcast %42 : vector<1x128xi1> to vector<8x128xi1>
    %44 = arith.select %43, %20, %22 : vector<8x128xi1>, vector<8x128xf32>
    %c0_13 = arith.constant 0 : index
    %c0_14 = arith.constant 0 : index
    %45 = vector.load %arg5[%c0_13, %c0_14] : memref<8x128xf32, #tpu.memory_space<vmem>>, vector<8x128xf32>
    tpu.vector_store %arg5[%c0_13, %c0_14], %44 {strides = array<i32>} : memref<8x128xf32, #tpu.memory_space<vmem>>, vector<8x128xf32>,
    return
  }
  func.func @transform_0(%arg0: i32) -> (i32, i32) {
    %c0_i32 = arith.constant 0 : i32
    %c0_i32_0 = arith.constant 0 : i32
    return %arg0, %c0_i32 : i32, i32
  }
  func.func @transform_1(%arg0: i32) -> (i32, i32) {
    %c0_i32 = arith.constant 0 : i32
    %c0_i32_0 = arith.constant 0 : i32
    return %arg0, %c0_i32 : i32, i32
  }
  func.func @transform_2(%arg0: i32) -> (i32, i32) {
    %c0_i32 = arith.constant 0 : i32
    %c0_i32_0 = arith.constant 0 : i32
    %c0_i32_1 = arith.constant 0 : i32
    return %c0_i32, %c0_i32_0 : i32, i32
  }
  func.func @transform_3(%arg0: i32) -> (i32, i32) {
    %c0_i32 = arith.constant 0 : i32
    %c0_i32_0 = arith.constant 0 : i32
    %c0_i32_1 = arith.constant 0 : i32
    return %c0_i32, %c0_i32_0 : i32, i32
  }
  func.func @transform_4(%arg0: i32) -> (i32, i32) {
    %c0_i32 = arith.constant 0 : i32
    %c0_i32_0 = arith.constant 0 : i32
    return %arg0, %c0_i32 : i32, i32
  }
}

</mosaic_0001>

<llo_original>
// kernel: bbox_transform.1
$region0: #{bbox_transform.1}
  #allocation0 [shape = 'u32[]', space=smem, size = 0x4, offset = 0x4, fixed_abs, tag = 'smem constant byte address 0x4 - core index']
  #allocation1 [shape = 'u32[144,128]{1,0:T(1,128)}', space=vmem, size = 0x12000, scoped, tag = 'internal scratch']
  %s0 = inlined_call_operand.vmem [shape: f32[16,128], index: 0, kind: input, shape index: {}]
  %s1 = inlined_call_operand.vmem [shape: f32[16,128], index: 1, kind: input, shape index: {}]
  %s2 = inlined_call_operand.vmem [shape: f32[1,128], index: 2, kind: input, shape index: {}]
  %s3 = inlined_call_operand.vmem [shape: f32[1,128], index: 3, kind: input, shape index: {}]
  %s4 = inlined_call_operand.vmem [shape: f32[16,128], index: 4, kind: output, shape index: {}]
  %s5 = sld [smem:[#allocation0]]
  $region49: #{bbox_transform.1} parent=0
    _
  %s7 = ssub.s32 1, %s5
  %s8 = scalar_select 0, %s7, %s5
  loop: start=0, step=1, limit=4
  $region2: #{bbox_transform.1} parent=0 // loop_pre_header
    _
  $region3: #{bbox_transform.1} parent=0 // loop_header
    %s10 = sphi 0, %s14
    %p11 = scmp.ge.s32.totalorder %s10, 4
    %s20 = sphi 0, %s22
    %s23 = sphi 0, %s20
    %s24 = sphi 0, %s23
    %s40 = sphi 0, %s24
    %s46 = sphi 0, %s48
    %s49 = sphi 0, %s46
    %s50 = sphi 0, %s49
    %s66 = sphi 0, %s50
    %s70 = sphi 0, %s70
    %s72 = sphi 0, %s70
    %s73 = sphi 0, %s72
    %s87 = sphi 0, %s73
    %s91 = sphi 0, %s91
    %s93 = sphi 0, %s91
    %s94 = sphi 0, %s93
    %s108 = sphi 0, %s94
    %s114 = sphi 0, %s116
    %s117 = sphi 0, %s114
    %s118 = sphi 0, %s117
    %s134 = sphi 0, %s118
  $region4: #{bbox_transform.1} parent=0 // loop_header_branch
    %13 = sbr.rel (%p11) target = $region8
  $region5: #{bbox_transform.1} parent=0 // loop_body
    %s15 = ssub.s32 %s10, 1
    %s16 = ssub.s32 %s10, 2
    %s17 = sadd.s32 %s10, 1
    %s18 = ssub.s32 %s10, %s17
    %p19 = scmp.eq.s32.totalorder %s18, 0
    %s21 = sadd.s32 %s20, 1
    %s22 = scalar_select %p19, %s20, %s21
    %p25 = pneg %p19
    %p26 = scmp.eq.s32.totalorder %s10, 1
    %p27 = por %p25, %p26
    %p28 = scmp.ne.s32.totalorder %s20, %s23
    %p29 = scmp.eq.s32.totalorder %s10, 0
    %p30 = por %p28, %p29
    %p31 = scmp.ne.s32.totalorder %s20, %s23
    %p32 = scmp.eq.s32.totalorder %s15, 1
    %p33 = por %p31, %p32
    %p34 = scmp.ne.s32.totalorder %s23, %s24
    %p35 = scmp.eq.s32.totalorder %s15, 0
    %p36 = por %p34, %p35
    %p37 = scmp.ne.s32.totalorder %s23, %s24
    %p38 = scmp.eq.s32.totalorder %s16, 1
    %p39 = por %p37, %p38
    %p41 = scmp.ne.s32.totalorder %s24, %s40
    %p42 = scmp.eq.s32.totalorder %s16, 0
    %p43 = por %p41, %p42
    %s44 = ssub.s32 %s10, %s17
    %p45 = scmp.eq.s32.totalorder %s44, 0
    %s47 = sadd.s32 %s46, 1
    %s48 = scalar_select %p45, %s46, %s47
    %p51 = pneg %p45
    %p52 = scmp.eq.s32.totalorder %s10, 1
    %p53 = por %p51, %p52
    %p54 = scmp.ne.s32.totalorder %s46, %s49
    %p55 = scmp.eq.s32.totalorder %s10, 0
    %p56 = por %p54, %p55
    %p57 = scmp.ne.s32.totalorder %s46, %s49
    %p58 = scmp.eq.s32.totalorder %s15, 1
    %p59 = por %p57, %p58
    %p60 = scmp.ne.s32.totalorder %s49, %s50
    %p61 = scmp.eq.s32.totalorder %s15, 0
    %p62 = por %p60, %p61
    %p63 = scmp.ne.s32.totalorder %s49, %s50
    %p64 = scmp.eq.s32.totalorder %s16, 1
    %p65 = por %p63, %p64
    %p67 = scmp.ne.s32.totalorder %s50, %s66
    %p68 = scmp.eq.s32.totalorder %s16, 0
    %p69 = por %p67, %p68
    %s71 = sadd.s32 %s70, 1
    %p74 = scmp.eq.s32.totalorder %s10, 1
    %p75 = scmp.ne.s32.totalorder %s70, %s72
    %p76 = scmp.eq.s32.totalorder %s10, 0
    %p77 = por %p75, %p76
    %p78 = scmp.ne.s32.totalorder %s70, %s72
    %p79 = scmp.eq.s32.totalorder %s15, 1
    %p80 = por %p78, %p79
    %p81 = scmp.ne.s32.totalorder %s72, %s73
    %p82 = scmp.eq.s32.totalorder %s15, 0
    %p83 = por %p81, %p82
    %p84 = scmp.ne.s32.totalorder %s72, %s73
    %p85 = scmp.eq.s32.totalorder %s16, 1
    %p86 = por %p84, %p85
    %p88 = scmp.ne.s32.totalorder %s73, %s87
    %p89 = scmp.eq.s32.totalorder %s16, 0
    %p90 = por %p88, %p89
    %s92 = sadd.s32 %s91, 1
    %p95 = scmp.eq.s32.totalorder %s10, 1
    %p96 = scmp.ne.s32.totalorder %s91, %s93
    %p97 = scmp.eq.s32.totalorder %s10, 0
    %p98 = por %p96, %p97
    %p99 = scmp.ne.s32.totalorder %s91, %s93
    %p100 = scmp.eq.s32.totalorder %s15, 1
    %p101 = por %p99, %p100
    %p102 = scmp.ne.s32.totalorder %s93, %s94
    %p103 = scmp.eq.s32.totalorder %s15, 0
    %p104 = por %p102, %p103
    %p105 = scmp.ne.s32.totalorder %s93, %s94
    %p106 = scmp.eq.s32.totalorder %s16, 1
    %p107 = por %p105, %p106
    %p109 = scmp.ne.s32.totalorder %s94, %s108
    %p110 = scmp.eq.s32.totalorder %s16, 0
    %p111 = por %p109, %p110
    %s112 = ssub.s32 %s10, %s17
    %p113 = scmp.eq.s32.totalorder %s112, 0
    %s115 = sadd.s32 %s114, 1
    %s116 = scalar_select %p113, %s114, %s115
    %p119 = pneg %p113
    %p120 = scmp.eq.s32.totalorder %s10, 1
    %p121 = por %p119, %p120
    %p122 = scmp.ne.s32.totalorder %s114, %s117
    %p123 = scmp.eq.s32.totalorder %s10, 0
    %p124 = por %p122, %p123
    %p125 = scmp.ne.s32.totalorder %s114, %s117
    %p126 = scmp.eq.s32.totalorder %s15, 1
    %p127 = por %p125, %p126
    %p128 = scmp.ne.s32.totalorder %s117, %s118
    %p129 = scmp.eq.s32.totalorder %s15, 0
    %p130 = por %p128, %p129
    %p131 = scmp.ne.s32.totalorder %s117, %s118
    %p132 = scmp.eq.s32.totalorder %s16, 1
    %p133 = por %p131, %p132
    %p135 = scmp.ne.s32.totalorder %s118, %s134
    %p136 = scmp.eq.s32.totalorder %s16, 0
    %p137 = por %p135, %p136
    %p138 = scmp.le.s32.totalorder 1, %s10
    %p139 = scmp.lt.s32.totalorder %s10, 3
    %p140 = pnand %p138, %p139
    %p141 = pneg %p140
    // Predicated region
    $region9: #{bbox_transform.1} parent=5 // pred_check
      _
    $region10: #{bbox_transform.1} parent=5 // pred_check_branch
      %143 = sbr.rel (%p140) target = $region12
    $region11: #{bbox_transform.1} parent=5 // pred_region
      %s144 = ssub.s32 %s10, 1
      // Predicated region
      $region13: #{bbox_transform.1} parent=11 // pred_check
        %p145 = pneg %p83
      $region14: #{bbox_transform.1} parent=11 // pred_check_branch
        %147 = sbr.rel (%p145) target = $region16
      $region15: #{bbox_transform.1} parent=11 // pred_region
        _
      $region16: #{bbox_transform.1} parent=11 // pred_fallthru
        _
      // Predicated region
      $region17: #{bbox_transform.1} parent=11 // pred_check
        %p148 = pneg %p104
      $region18: #{bbox_transform.1} parent=11 // pred_check_branch
        %150 = sbr.rel (%p148) target = $region20
      $region19: #{bbox_transform.1} parent=11 // pred_region
        _
      $region20: #{bbox_transform.1} parent=11 // pred_fallthru
        _
    $region12: #{bbox_transform.1} parent=5 // pred_fallthru
      _
    %p151 = scmp.lt.s32.totalorder %s10, 2
    // Predicated region
    $region21: #{bbox_transform.1} parent=5 // pred_check
      %p152 = pneg %p151
    $region22: #{bbox_transform.1} parent=5 // pred_check_branch
      %154 = sbr.rel (%p152) target = $region24
    $region23: #{bbox_transform.1} parent=5 // pred_region
      // Predicated region
      $region25: #{bbox_transform.1} parent=23 // pred_check
        %p155 = pneg %p30
      $region26: #{bbox_transform.1} parent=23 // pred_check_branch
        %157 = sbr.rel (%p155) target = $region28
      $region27: #{bbox_transform.1} parent=23 // pred_region
        %p158 = scmp.lt.s32.totalorder %s10, 1
        %s159 = scalar_select %p158, %s10, 1
        %s160 = smul.addr %s159, 8
        %s161 = scalar_lea.vmem %s0, %s160
      $region28: #{bbox_transform.1} parent=23 // pred_fallthru
        _
      // Predicated region
      $region29: #{bbox_transform.1} parent=23 // pred_check
        %p162 = pneg %p56
      $region30: #{bbox_transform.1} parent=23 // pred_check_branch
        %164 = sbr.rel (%p162) target = $region32
      $region31: #{bbox_transform.1} parent=23 // pred_region
        %p165 = scmp.lt.s32.totalorder %s10, 1
        %s166 = scalar_select %p165, %s10, 1
        %s167 = smul.addr %s166, 8
        %s168 = scalar_lea.vmem %s1, %s167
      $region32: #{bbox_transform.1} parent=23 // pred_fallthru
        _
    $region24: #{bbox_transform.1} parent=5 // pred_fallthru
      _
    %p169 = scmp.le.s32.totalorder 1, %s10
    %p170 = scmp.lt.s32.totalorder %s10, 3
    %p171 = pnand %p169, %p170
    %p172 = pneg %p171
    // Predicated region
    $region33: #{bbox_transform.1} parent=5 // pred_check
      _
    $region34: #{bbox_transform.1} parent=5 // pred_check_branch
      %174 = sbr.rel (%p171) target = $region36
    $region35: #{bbox_transform.1} parent=5 // pred_region
      %s175 = ssub.s32 %s10, 1
      %p176 = scmp.lt.s32.totalorder %s15, 1
      %s177 = scalar_select %p176, %s15, 1
      %s178 = smul.addr %s177, 8
      %s179 = scalar_lea.vmem %s0, %s178
      %p180 = pneg %p36
      %p181 = pneg %p33
      %p182 = scmp.lt.s32.totalorder %s15, 1
      %s183 = scalar_select %p182, %s15, 1
      %s184 = smul.addr %s183, 8
      %s185 = scalar_lea.vmem %s1, %s184
      %p186 = pneg %p62
      %p187 = pneg %p59
      %p188 = pneg %p83
      %p189 = pneg %p80
      %p190 = pneg %p104
      %p191 = pneg %p101
      %p192 = pneg %p130
      %p193 = pneg %p127
      %p194 = scmp.lt.s32.totalorder %s15, 1
      %s195 = scalar_select %p194, %s15, 1
      %s196 = smul.addr %s195, 8
      %s197 = scalar_lea.vmem %s4, %s196
      %p198 = scmp.lt.s32.totalorder %s15, 1
      %s199 = scalar_select %p198, %s15, 1
      %s200 = smul.addr %s199, 8
      %s201 = scalar_lea.vmem %s0, %s200
      %p202 = scmp.lt.s32.totalorder %s15, 1
      %s203 = scalar_select %p202, %s15, 1
      %s204 = smul.addr %s203, 8
      %s205 = scalar_lea.vmem %s1, %s204
      %p206 = scmp.lt.s32.totalorder %s15, 1
      %s207 = scalar_select %p206, %s15, 1
      %s208 = smul.addr %s207, 8
      %s209 = scalar_lea.vmem %s4, %s208
      %v210 = vld [vmem:[%s201] sm:$0xff]
      %v211 = vld [vmem:[%s205] sm:$0xff]
      %v212 = vld [vmem:[%s2] sm:$0x1]
      %v214 = vlaneseq
      %v215 = vshrl.u32 %v214, 7
      %v216 = vsub.s32 0, %v215
      %v217 = vrot.slane %v212, %v216
      %v219 = vmul.f32 %v211, %v217
      %v220 = vld [vmem:[%s3] sm:$0x1]
      %v222 = vlaneseq
      %v223 = vshrl.u32 %v222, 7
      %v224 = vsub.s32 0, %v223
      %v225 = vrot.slane %v220, %v224
      %v227 = vadd.f32 %v219, %v225
      %228 = vrot.lane.b32.xlu0 %v210, 126
      %v229 = vpop.permute.xlu0 %228
      %230 = vrot.lane.b32.xlu0 %v227, 126
      %v231 = vpop.permute.xlu0 %230
      %v232 = vsub.f32 %v229, %v210
      %v233 = vmul.f32 %v232, 0.5
      %v234 = vadd.f32 %v210, %v233
      %v235 = vmul.f32 %v227, %v232
      %v236 = vadd.f32 %v234, %v235
      %v237 = vmul.f32 %v231, 1.442695
      %v238 = vpow.pop %v237
      %v239 = vmul.f32 %v238, %v232
      %v240 = vmul.f32 %v239, 0.5
      %v241 = vsub.f32 %v236, %v240
      %v242 = vadd.f32 %v236, %v240
      %243 = vrot.lane.b32.xlu0 %v242, 2
      %v244 = vpop.permute.xlu0 %243
      %v245 = vlaneseq
      %v246 = vand.u32 %v245, 127
      %vm247 = vcmp.lt.s32.totalorder %v246, 0
      %v248 = vsub.s32 0, %v246
      %v249 = vsel %vm247, %v248, %v246
      %v250 = vshrl.u32 %v249, 2
      %v251 = vand.u32 %v249, 3
      %v252 = vsub.s32 0, %v251
      %v253 = vsel %vm247, %v252, %v251
      %vm254 = vcmp.ne.s32.totalorder %v253, 0
      %vm255 = vcmp.lt.s32.totalorder %v253, 0
      %vm256 = vmand %vm255, %vm254
      %v257 = vadd.s32 %v253, 4
      %v258 = vsel %vm256, %v257, %v253
      %vm259 = vcmp.lt.s32.totalorder %v258, 2
      %v260 = vsel %vm259, 1, 0
      %vm261 = vcmp.eq.s32.totalorder %v260, 1
      %v262 = vsel %vm261, %v241, %v244
      %263 = vst [vmem:[%s209] sm:$0xff] %v262
      %p264 = scmp.lt.s32.totalorder %s15, 1
      %s265 = scalar_select %p264, %s15, 1
      %s266 = smul.addr %s265, 8
      %s267 = scalar_lea.vmem %s4, %s266
      // Predicated region
      $region37: #{bbox_transform.1} parent=35 // pred_check
        %p268 = pneg %p127
      $region38: #{bbox_transform.1} parent=35 // pred_check_branch
        %270 = sbr.rel (%p268) target = $region40
      $region39: #{bbox_transform.1} parent=35 // pred_region
        _
      $region40: #{bbox_transform.1} parent=35 // pred_fallthru
        _
    $region36: #{bbox_transform.1} parent=5 // pred_fallthru
      _
    %p271 = scmp.le.s32.totalorder 2, %s10
    // Predicated region
    $region41: #{bbox_transform.1} parent=5 // pred_check
      %p272 = pneg %p271
    $region42: #{bbox_transform.1} parent=5 // pred_check_branch
      %274 = sbr.rel (%p272) target = $region44
    $region43: #{bbox_transform.1} parent=5 // pred_region
      %s275 = ssub.s32 %s10, 2
      // Predicated region
      $region45: #{bbox_transform.1} parent=43 // pred_check
        %p276 = pneg %p133
      $region46: #{bbox_transform.1} parent=43 // pred_check_branch
        %278 = sbr.rel (%p276) target = $region48
      $region47: #{bbox_transform.1} parent=43 // pred_region
        %p279 = scmp.lt.s32.totalorder %s16, 1
        %s280 = scalar_select %p279, %s16, 1
        %s281 = smul.addr %s280, 8
        %s282 = scalar_lea.vmem %s4, %s281
      $region48: #{bbox_transform.1} parent=43 // pred_fallthru
        _
    $region44: #{bbox_transform.1} parent=5 // pred_fallthru
      _
  $region6: #{bbox_transform.1} parent=0 // loop_footer
    %s14 = sadd.s32 1, %s10
  $region7: #{bbox_transform.1} parent=0 // loop_footer_branch
    %9 = sbr.rel target = $region3
  $region8: #{bbox_transform.1} parent=0 // loop_exit
    _

</llo_original>
